<compile_context>
chip_gen: v7x
topology: tpu7x:2x2x1
jax: 0.10.0
libtpu: 0.0.40
codegen_flags: <defaults>
</compile_context>

<pallas_src>
import jax
import jax.numpy as jnp
from jax.experimental import pallas as pl
from jax.experimental.pallas import tpu as pltpu

_MIN_TILE = 16  # bf16 sublane tile is (16, 128); keep batch tiles 16-aligned


def _round_up(x, m):
    return ((x + m - 1) // m) * m


def _qnet_kernel(s_ref, a_ref, w1s_ref, w1a_ref, b1_ref,
                 w2_ref, b2_ref, w3_ref, b3_ref, out_ref):
    # In-kernel bf16 cast of activations (VPU, hidden under the MXU dots).
    s = s_ref[...].astype(jnp.bfloat16)
    a = a_ref[...].astype(jnp.bfloat16)

    # Layer 1: Linear(cat([state, action])) as two MXU dots (no concat copy).
    h = jnp.dot(s, w1s_ref[...], preferred_element_type=jnp.float32)
    h = h + jnp.dot(a, w1a_ref[...], preferred_element_type=jnp.float32)
    h = jnp.maximum(h + b1_ref[...], 0.0)      # bias + ReLU in f32 (VPU)
    h = h.astype(jnp.bfloat16)                 # bf16 operand for next MXU dot

    # Layer 2: Linear + ReLU (f32 accumulator kept for the output layer).
    h = jnp.dot(h, w2_ref[...], preferred_element_type=jnp.float32)
    h = jnp.maximum(h + b2_ref[...], 0.0)

    # Output layer (hidden -> 1): VPU multiply + XLU lane reduce, no padded dot.
    q = jnp.sum(h * w3_ref[...], axis=-1, keepdims=True) + b3_ref[...]
    out_ref[...] = q.astype(out_ref.dtype)


def prepare_params(params):
    """One-time conversion of f32 (in,out) params to kernel operand layout.

    Call this once (outside the per-step forward) so bf16 weight casts are not
    re-done on every kernel invocation.
    """
    hidden = params["w1"].shape[1]
    return {
        "w1": params["w1"].astype(jnp.bfloat16),          # (sd+ad, H) bf16
        "b1": params["b1"].reshape(1, hidden).astype(jnp.float32),
        "w2": params["w2"].astype(jnp.bfloat16),          # (H, H) bf16
        "b2": params["b2"].reshape(1, hidden).astype(jnp.float32),
        "w3_row": params["w3"].reshape(1, hidden).astype(jnp.float32),  # (1, H)
        "b3": params["b3"].reshape(1, 1).astype(jnp.float32),           # (1, 1)
    }


def q_network(state, action, prepped, *, tile_b=512):
    """SAC critic forward pass: Q(s, a).  Returns [B, 1] float32.

    `prepped` must come from prepare_params(params).
    """
    B, sd = state.shape
    ad = action.shape[1]
    hidden = prepped["w2"].shape[0]

    # --- batch tiling ---------------------------------------------------
    b_aligned = _round_up(B, _MIN_TILE)
    tile_b = max(_MIN_TILE, min(tile_b, b_aligned))
    # Prefer >= 2 grid steps so v7x's two TensorCores both get work.
    if b_aligned >= 2 * _MIN_TILE:
        tile_b = min(tile_b, _round_up(b_aligned // 2, _MIN_TILE))
    B_pad = _round_up(B, tile_b)

    s = state.astype(jnp.float32)
    a = action.astype(jnp.float32)
    if B_pad != B:
        s = jnp.pad(s, ((0, B_pad - B), (0, 0)))
        a = jnp.pad(a, ((0, B_pad - B), (0, 0)))

    w1 = prepped["w1"]
    w1s, w1a = w1[:sd], w1[sd:]
    b1, w2, b2 = prepped["b1"], prepped["w2"], prepped["b2"]
    w3_row, b3 = prepped["w3_row"], prepped["b3"]

    grid = (B_pad // tile_b,)

    def batch_spec(width):
        return pl.BlockSpec((tile_b, width), lambda i: (i, 0))

    def resident(arr):  # same block every grid step -> stays in VMEM
        return pl.BlockSpec(arr.shape, lambda i: (0, 0))

    flops = 2 * B_pad * (sd * hidden + ad * hidden + hidden * hidden + hidden)
    bytes_accessed = (
        s.size * 4 + a.size * 4                         # f32 activations in
        + (w1s.size + w1a.size + w2.size) * 2           # bf16 weights
        + (b1.size + b2.size + w3_row.size + b3.size) * 4
        + B_pad * 4)                                    # narrow f32 output

    out = pl.pallas_call(
        _qnet_kernel,
        out_shape=jax.ShapeDtypeStruct((B_pad, 1), jnp.float32),
        grid=grid,
        in_specs=[
            batch_spec(sd), batch_spec(ad),
            resident(w1s), resident(w1a), resident(b1),
            resident(w2), resident(b2),
            resident(w3_row), resident(b3),
        ],
        out_specs=pl.BlockSpec((tile_b, 1), lambda i: (i, 0)),
        compiler_params=pltpu.CompilerParams(
            dimension_semantics=("parallel",)),   # megacore split on v7x
        cost_estimate=pl.CostEstimate(
            flops=flops, bytes_accessed=bytes_accessed, transcendentals=0),
    )(s, a, w1s, w1a, b1, w2, b2, w3_row, b3)

    return out[:B]


def init_params(key, state_dim, action_dim, hidden_dim=256):
    """Mimic PyTorch init: kaiming_normal_(fan_in, relu) weights, zero biases.

    Weights stored (in_dim, out_dim) = transpose of nn.Linear's (out, in).
    """
    dims = [state_dim + action_dim, hidden_dim, hidden_dim, 1]
    params = {}
    for idx, (din, dout) in enumerate(zip(dims[:-1], dims[1:]), start=1):
        key, kw = jax.random.split(key)
        std = jnp.sqrt(jnp.float32(2.0 / din))     # relu gain / sqrt(fan_in)
        params[f"w{idx}"] = std * jax.random.normal(kw, (din, dout), jnp.float32)
        params[f"b{idx}"] = jnp.zeros((1, dout), jnp.float32)
    return params


def q_network_ref_bf16(state, action, params):
    """Reference mirroring the kernel path: bf16 MXU operands / f32 accumulate,
    f32 output layer as an explicit reduce."""
    x = jnp.concatenate([state, action], axis=1).astype(jnp.bfloat16)
    h = jnp.dot(x, params["w1"].astype(jnp.bfloat16),
                preferred_element_type=jnp.float32) + params["b1"]
    h = jnp.maximum(h, 0.0).astype(jnp.bfloat16)
    h = jnp.dot(h, params["w2"].astype(jnp.bfloat16),
                preferred_element_type=jnp.float32) + params["b2"]
    h = jnp.maximum(h, 0.0)
    w3_row = params["w3"].reshape(1, -1).astype(jnp.float32)
    return jnp.sum(h * w3_row, axis=-1, keepdims=True) + params["b3"]


def q_network_ref_f32(state, action, params):
    """Pure-f32 reference (matches the PyTorch module semantics)."""
    x = jnp.concatenate([state, action], axis=1)
    h = jnp.maximum(x @ params["w1"] + params["b1"], 0.0)
    h = jnp.maximum(h @ params["w2"] + params["b2"], 0.0)
    return h @ params["w3"] + params["b3"]


if __name__ == "__main__":
    key = jax.random.PRNGKey(0)
    state_dim, action_dim, hidden_dim = 16, 4, 256
    batch = 2

    k_params, k_s, k_a = jax.random.split(key, 3)
    params = init_params(k_params, state_dim, action_dim, hidden_dim)
    prepped = prepare_params(params)      # one-time bf16 weight conversion
    state = jax.random.normal(k_s, (batch, state_dim), jnp.float32)
    action = jax.random.normal(k_a, (batch, action_dim), jnp.float32)

    q = q_network(state, action, prepped)
    q = jax.block_until_ready(q)

    assert q.shape == (batch, 1), q.shape

    q_bf16_ref = q_network_ref_bf16(state, action, params)
    assert jnp.allclose(q, q_bf16_ref, atol=2e-2, rtol=2e-2), (q, q_bf16_ref)

    q_f32_ref = q_network_ref_f32(state, action, params)
    assert jnp.allclose(q, q_f32_ref, atol=1e-1, rtol=1e-1), (q, q_f32_ref)

    print("KERNEL_OK")
</pallas_src>

<mosaic_0001>
module attributes {stable_mosaic.version = 11 : i64} {
  func.func @_qnet_kernel(%arg0: i32, %arg1: memref<16x16xf32, #tpu.memory_space<vmem>>, %arg2: memref<16x4xf32, #tpu.memory_space<vmem>>, %arg3: memref<16x256xbf16, #tpu.memory_space<vmem>>, %arg4: memref<4x256xbf16, #tpu.memory_space<vmem>>, %arg5: memref<1x256xf32, #tpu.memory_space<vmem>>, %arg6: memref<256x256xbf16, #tpu.memory_space<vmem>>, %arg7: memref<1x256xf32, #tpu.memory_space<vmem>>, %arg8: memref<1x256xf32, #tpu.memory_space<vmem>>, %arg9: memref<1x1xf32, #tpu.memory_space<vmem>>, %arg10: memref<16x1xf32, #tpu.memory_space<vmem>>) attributes {dimension_semantics = [#tpu.dimension_semantics<parallel>], iteration_bounds = array<i64: 1>, scalar_prefetch = 0 : i64, scratch_operands = 0 : i64, tpu.core_type = #tpu.core_type<tc>, window_params = [{transform_indices = @transform_0, window_bounds = array<i64: 16, 16>}, {transform_indices = @transform_1, window_bounds = array<i64: 16, 4>}, {pipeline_mode = #tpu.pipeline_mode<synchronous>, transform_indices = @transform_2, window_bounds = array<i64: 16, 256>}, {pipeline_mode = #tpu.pipeline_mode<synchronous>, transform_indices = @transform_3, window_bounds = array<i64: 4, 256>}, {pipeline_mode = #tpu.pipeline_mode<synchronous>, transform_indices = @transform_4, window_bounds = array<i64: 1, 256>}, {pipeline_mode = #tpu.pipeline_mode<synchronous>, transform_indices = @transform_5, window_bounds = array<i64: 256, 256>}, {pipeline_mode = #tpu.pipeline_mode<synchronous>, transform_indices = @transform_6, window_bounds = array<i64: 1, 256>}, {pipeline_mode = #tpu.pipeline_mode<synchronous>, transform_indices = @transform_7, window_bounds = array<i64: 1, 256>}, {pipeline_mode = #tpu.pipeline_mode<synchronous>, transform_indices = @transform_8, window_bounds = array<i64: 1, 1>}, {transform_indices = @transform_9, window_bounds = array<i64: 16, 1>}]} {
    %c0 = arith.constant 0 : index
    %c0_0 = arith.constant 0 : index
    %0 = vector.load %arg1[%c0, %c0_0] : memref<16x16xf32, #tpu.memory_space<vmem>>, vector<16x16xf32>
    %1 = arith.truncf %0 : vector<16x16xf32> to vector<16x16xbf16>
    %c0_1 = arith.constant 0 : index
    %c0_2 = arith.constant 0 : index
    %2 = vector.load %arg2[%c0_1, %c0_2] : memref<16x4xf32, #tpu.memory_space<vmem>>, vector<16x4xf32>
    %3 = arith.truncf %2 : vector<16x4xf32> to vector<16x4xbf16>
    %c0_3 = arith.constant 0 : index
    %c0_4 = arith.constant 0 : index
    %4 = vector.load %arg3[%c0_3, %c0_4] : memref<16x256xbf16, #tpu.memory_space<vmem>>, vector<16x256xbf16>
    %cst = arith.constant dense<0.000000e+00> : vector<16x256xf32>
    %5 = tpu.matmul %1, %4, %cst {dimension_numbers = #tpu.dot_dimension_numbers<[1], [0], [0], [1], [0, 0, 1, 1], [], []>} : vector<16x16xbf16>, vector<16x256xbf16>, vector<16x256xf32> -> vector<16x256xf32>
    %c0_5 = arith.constant 0 : index
    %c0_6 = arith.constant 0 : index
    %6 = vector.load %arg4[%c0_5, %c0_6] : memref<4x256xbf16, #tpu.memory_space<vmem>>, vector<4x256xbf16>
    %cst_7 = arith.constant dense<0.000000e+00> : vector<16x256xf32>
    %7 = tpu.matmul %3, %6, %cst_7 {dimension_numbers = #tpu.dot_dimension_numbers<[1], [0], [0], [1], [0, 0, 1, 1], [], []>} : vector<16x4xbf16>, vector<4x256xbf16>, vector<16x256xf32> -> vector<16x256xf32>
    %8 = arith.addf %5, %7 : vector<16x256xf32>
    %c0_8 = arith.constant 0 : index
    %c0_9 = arith.constant 0 : index
    %9 = vector.load %arg5[%c0_8, %c0_9] : memref<1x256xf32, #tpu.memory_space<vmem>>, vector<1x256xf32>
    %10 = vector.broadcast %9 : vector<1x256xf32> to vector<16x256xf32>
    %11 = arith.addf %8, %10 : vector<16x256xf32>
    %cst_10 = arith.constant 0.000000e+00 : f32
    %12 = vector.broadcast %cst_10 : f32 to vector<16x256xf32>
    %13 = arith.maximumf %11, %12 : vector<16x256xf32>
    %14 = arith.truncf %13 : vector<16x256xf32> to vector<16x256xbf16>
    %c0_11 = arith.constant 0 : index
    %c0_12 = arith.constant 0 : index
    %15 = vector.load %arg6[%c0_11, %c0_12] : memref<256x256xbf16, #tpu.memory_space<vmem>>, vector<256x256xbf16>
    %cst_13 = arith.constant dense<0.000000e+00> : vector<16x256xf32>
    %16 = tpu.matmul %14, %15, %cst_13 {dimension_numbers = #tpu.dot_dimension_numbers<[1], [0], [0], [1], [0, 0, 1, 1], [], []>} : vector<16x256xbf16>, vector<256x256xbf16>, vector<16x256xf32> -> vector<16x256xf32>
    %c0_14 = arith.constant 0 : index
    %c0_15 = arith.constant 0 : index
    %17 = vector.load %arg7[%c0_14, %c0_15] : memref<1x256xf32, #tpu.memory_space<vmem>>, vector<1x256xf32>
    %18 = vector.broadcast %17 : vector<1x256xf32> to vector<16x256xf32>
    %19 = arith.addf %16, %18 : vector<16x256xf32>
    %cst_16 = arith.constant 0.000000e+00 : f32
    %20 = vector.broadcast %cst_16 : f32 to vector<16x256xf32>
    %21 = arith.maximumf %19, %20 : vector<16x256xf32>
    %c0_17 = arith.constant 0 : index
    %c0_18 = arith.constant 0 : index
    %22 = vector.load %arg8[%c0_17, %c0_18] : memref<1x256xf32, #tpu.memory_space<vmem>>, vector<1x256xf32>
    %23 = vector.broadcast %22 : vector<1x256xf32> to vector<16x256xf32>
    %24 = arith.mulf %21, %23 : vector<16x256xf32>
    %cst_19 = arith.constant dense<0.000000e+00> : vector<16xf32>
    %25 = vector.multi_reduction <add>, %24, %cst_19 [1] : vector<16x256xf32> to vector<16xf32>
    %26 = vector.shape_cast %25 : vector<16xf32> to vector<16x1xf32>
    %c0_20 = arith.constant 0 : index
    %c0_21 = arith.constant 0 : index
    %27 = vector.load %arg9[%c0_20, %c0_21] : memref<1x1xf32, #tpu.memory_space<vmem>>, vector<1x1xf32>
    %28 = vector.broadcast %27 : vector<1x1xf32> to vector<16x1xf32>
    %29 = arith.addf %26, %28 : vector<16x1xf32>
    %c0_22 = arith.constant 0 : index
    %c0_23 = arith.constant 0 : index
    %30 = vector.load %arg10[%c0_22, %c0_23] : memref<16x1xf32, #tpu.memory_space<vmem>>, vector<16x1xf32>
    tpu.vector_store %arg10[%c0_22, %c0_23], %29 {strides = array<i32>} : memref<16x1xf32, #tpu.memory_space<vmem>>, vector<16x1xf32>,
    return
  }
  func.func @transform_0(%arg0: i32) -> (i32, i32) {
    %c0_i32 = arith.constant 0 : i32
    %c0_i32_0 = arith.constant 0 : i32
    return %arg0, %c0_i32 : i32, i32
  }
  func.func @transform_1(%arg0: i32) -> (i32, i32) {
    %c0_i32 = arith.constant 0 : i32
    %c0_i32_0 = arith.constant 0 : i32
    return %arg0, %c0_i32 : i32, i32
  }
  func.func @transform_2(%arg0: i32) -> (i32, i32) {
    %c0_i32 = arith.constant 0 : i32
    %c0_i32_0 = arith.constant 0 : i32
    %c0_i32_1 = arith.constant 0 : i32
    return %c0_i32, %c0_i32_0 : i32, i32
  }
  func.func @transform_3(%arg0: i32) -> (i32, i32) {
    %c0_i32 = arith.constant 0 : i32
    %c0_i32_0 = arith.constant 0 : i32
    %c0_i32_1 = arith.constant 0 : i32
    return %c0_i32, %c0_i32_0 : i32, i32
  }
  func.func @transform_4(%arg0: i32) -> (i32, i32) {
    %c0_i32 = arith.constant 0 : i32
    %c0_i32_0 = arith.constant 0 : i32
    %c0_i32_1 = arith.constant 0 : i32
    return %c0_i32, %c0_i32_0 : i32, i32
  }
  func.func @transform_5(%arg0: i32) -> (i32, i32) {
    %c0_i32 = arith.constant 0 : i32
    %c0_i32_0 = arith.constant 0 : i32
    %c0_i32_1 = arith.constant 0 : i32
    return %c0_i32, %c0_i32_0 : i32, i32
  }
  func.func @transform_6(%arg0: i32) -> (i32, i32) {
    %c0_i32 = arith.constant 0 : i32
    %c0_i32_0 = arith.constant 0 : i32
    %c0_i32_1 = arith.constant 0 : i32
    return %c0_i32, %c0_i32_0 : i32, i32
  }
  func.func @transform_7(%arg0: i32) -> (i32, i32) {
    %c0_i32 = arith.constant 0 : i32
    %c0_i32_0 = arith.constant 0 : i32
    %c0_i32_1 = arith.constant 0 : i32
    return %c0_i32, %c0_i32_0 : i32, i32
  }
  func.func @transform_8(%arg0: i32) -> (i32, i32) {
    %c0_i32 = arith.constant 0 : i32
    %c0_i32_0 = arith.constant 0 : i32
    %c0_i32_1 = arith.constant 0 : i32
    return %c0_i32, %c0_i32_0 : i32, i32
  }
  func.func @transform_9(%arg0: i32) -> (i32, i32) {
    %c0_i32 = arith.constant 0 : i32
    %c0_i32_0 = arith.constant 0 : i32
    return %arg0, %c0_i32 : i32, i32
  }
}

</mosaic_0001>

<llo_original>
// kernel: tpu_custom_call.1
$region0: #{tpu_custom_call.1}
  #allocation0 [shape = 'u32[]', space=smem, size = 0x4, offset = 0x4, fixed_abs, tag = 'smem constant byte address 0x4 - core index']
  #allocation1 [shape = 'u32[144,128]{1,0:T(1,128)}', space=vmem, size = 0x12000, scoped, tag = 'internal scratch']
  #allocation2 [shape = 'f32[1,1]{1,0:T(1,128)S(1)}', space=vmem, size = 0x200, scoped, tag = 'scoped memory for tpu_custom_call.1']
  %s0 = inlined_call_operand.vmem [shape: f32[16,16], index: 0, kind: input, shape index: {}]
  %s1 = inlined_call_operand.vmem [shape: f32[16,4], index: 1, kind: input, shape index: {}]
  %s2 = inlined_call_operand.hbm [shape: bf16[16,256], index: 2, kind: input, shape index: {}]
  %s3 = inlined_call_operand.vmem [shape: bf16[4,256], index: 3, kind: input, shape index: {}]
  %s4 = inlined_call_operand.vmem [shape: f32[1,256], index: 4, kind: input, shape index: {}]
  %s5 = inlined_call_operand.hbm [shape: bf16[256,256], index: 5, kind: input, shape index: {}]
  %s6 = inlined_call_operand.vmem [shape: f32[1,256], index: 6, kind: input, shape index: {}]
  %s7 = inlined_call_operand.vmem [shape: f32[1,256], index: 7, kind: input, shape index: {}]
  %s8 = inlined_call_operand.<no memory space> [shape: f32[1,1], index: 8, kind: input, shape index: {}]
  %s9 = inlined_call_operand.vmem [shape: f32[16,1], index: 9, kind: output, shape index: {}]
  %s10 = sld [smem:[#allocation0]]
  $region54: #{tpu_custom_call.1} parent=0
    _
  %s12 = ssub.s32 1, %s10
  %s13 = scalar_select 0, %s12, %s10
  %v14 = vstv %s8
  %15 = vst [vmem:[#allocation2] sm:$0x1] %v14
  $region1: #{tpu_custom_call.1} parent=0
    #allocation3 [shape = 'u8[8192]{0}', space=vmem, size = 0x2000, scoped, tag = 'input window, operand 2, single buffered']
    #allocation4 [shape = 's32[1]{0}', space=sflag, size = 0x4, scoped, tag = 'scoped memory for tpu_custom_call.1']
    #allocation5 [shape = 'u8[131072]{0}', space=vmem, size = 0x20000, scoped, tag = 'input window, operand 5, single buffered']
    #allocation6 [shape = 's32[1]{0}', space=sflag, size = 0x4, scoped, tag = 'scoped memory for tpu_custom_call.1']
    %16 = vsyncpa [#allocation4], 0
    %17 = vsyncpa [#allocation6], 0
    // Predicated region
    $region2: #{tpu_custom_call.1} parent=1 // pred_check
      _
    $region3: #{tpu_custom_call.1} parent=1 // pred_check_branch
      %19 = sbr.rel (0) target = $region5
    $region4: #{tpu_custom_call.1} parent=1 // pred_region
      _
    $region5: #{tpu_custom_call.1} parent=1 // pred_fallthru
      _
    // Predicated region
    $region6: #{tpu_custom_call.1} parent=1 // pred_check
      _
    $region7: #{tpu_custom_call.1} parent=1 // pred_check_branch
      %21 = sbr.rel (0) target = $region9
    $region8: #{tpu_custom_call.1} parent=1 // pred_region
      _
    $region9: #{tpu_custom_call.1} parent=1 // pred_fallthru
      _
    // Predicated region
    $region10: #{tpu_custom_call.1} parent=1 // pred_check
      _
    $region11: #{tpu_custom_call.1} parent=1 // pred_check_branch
      %23 = sbr.rel (0) target = $region13
    $region12: #{tpu_custom_call.1} parent=1 // pred_region
      %s25 = ssub.s32 256, 256
      %26 = vsyncadd [#allocation4], %s25
      %s27 = sshll.u32 [#allocation3], 4
      %s28 = int_to_ptr.vmem [resolvable:$true] %s27
      %33 = dma.hbm_to_vmem [thread:$0]  %s2, 256, %s28, [#allocation4], 128, 128, 8
    $region13: #{tpu_custom_call.1} parent=1 // pred_fallthru
      _
    // Predicated region
    $region14: #{tpu_custom_call.1} parent=1 // pred_check
      _
    $region15: #{tpu_custom_call.1} parent=1 // pred_check_branch
      %35 = sbr.rel (0) target = $region17
    $region16: #{tpu_custom_call.1} parent=1 // pred_region
      _
    $region17: #{tpu_custom_call.1} parent=1 // pred_fallthru
      _
    // Predicated region
    $region18: #{tpu_custom_call.1} parent=1 // pred_check
      _
    $region19: #{tpu_custom_call.1} parent=1 // pred_check_branch
      %37 = sbr.rel (0) target = $region21
    $region20: #{tpu_custom_call.1} parent=1 // pred_region
      _
    $region21: #{tpu_custom_call.1} parent=1 // pred_fallthru
      _
    // Predicated region
    $region22: #{tpu_custom_call.1} parent=1 // pred_check
      _
    $region23: #{tpu_custom_call.1} parent=1 // pred_check_branch
      %39 = sbr.rel (0) target = $region25
    $region24: #{tpu_custom_call.1} parent=1 // pred_region
      %s41 = ssub.s32 4096, 4096
      %42 = vsyncadd [#allocation6], %s41
      %s43 = sshll.u32 [#allocation5], 4
      %s44 = int_to_ptr.vmem [resolvable:$true] %s43
      %49 = dma.hbm_to_vmem [thread:$0]  %s5, 4096, %s44, [#allocation6], 128, 128, 8
    $region25: #{tpu_custom_call.1} parent=1 // pred_fallthru
      _
    // Predicated region
    $region26: #{tpu_custom_call.1} parent=1 // pred_check
      _
    $region27: #{tpu_custom_call.1} parent=1 // pred_check_branch
      %51 = sbr.rel (0) target = $region29
    $region28: #{tpu_custom_call.1} parent=1 // pred_region
      _
    $region29: #{tpu_custom_call.1} parent=1 // pred_fallthru
      _
    // Predicated region
    $region30: #{tpu_custom_call.1} parent=1 // pred_check
      _
    $region31: #{tpu_custom_call.1} parent=1 // pred_check_branch
      %53 = sbr.rel (0) target = $region33
    $region32: #{tpu_custom_call.1} parent=1 // pred_region
      _
    $region33: #{tpu_custom_call.1} parent=1 // pred_fallthru
      _
    // Predicated region
    $region34: #{tpu_custom_call.1} parent=1 // pred_check
      _
    $region35: #{tpu_custom_call.1} parent=1 // pred_check_branch
      %55 = sbr.rel (0) target = $region37
    $region36: #{tpu_custom_call.1} parent=1 // pred_region
      _
    $region37: #{tpu_custom_call.1} parent=1 // pred_fallthru
      _
    // Predicated region
    $region38: #{tpu_custom_call.1} parent=1 // pred_check
      _
    $region39: #{tpu_custom_call.1} parent=1 // pred_check_branch
      %57 = sbr.rel (0) target = $region41
    $region40: #{tpu_custom_call.1} parent=1 // pred_region
      %58 = dma.done [#allocation4], 256
    $region41: #{tpu_custom_call.1} parent=1 // pred_fallthru
      _
    // Predicated region
    $region42: #{tpu_custom_call.1} parent=1 // pred_check
      _
    $region43: #{tpu_custom_call.1} parent=1 // pred_check_branch
      %60 = sbr.rel (0) target = $region45
    $region44: #{tpu_custom_call.1} parent=1 // pred_region
      %61 = dma.done [#allocation6], 4096
    $region45: #{tpu_custom_call.1} parent=1 // pred_fallthru
      _
    %v63 = vld [vmem:[%s0] sm:$0xff]
    %v64 = vld [vmem:[%s0 + $0x8] sm:$0xff]
    %v65 = vpack.c.bf16 %v64, %v63
    %v66 = vld [vmem:[%s1] sm:$0xff]
    %v67 = vld [vmem:[%s1 + $0x8] sm:$0xff]
    %v68 = vpack.c.bf16 %v67, %v66
    %v69 = vld [vmem:[#allocation3] sm:$0xff]
    %v70 = vld [vmem:[#allocation3 + $0x8] sm:$0xff]
    %v71 = vld [vmem:[%s3] sm:$0xf]
    %v74 = vunpack.c.l.s4 1983009808
    %v75 = vunpack.c.0.s8 %v74
    %v76 = vlaneseq
    %v77 = vshrl.u32 %v76, 7
    %v78 = vsub.s32 %v75, %v77
    %v79 = vrot.slane %v71, %v78
    %v80 = vcombine.high %v79, %v79
    %vm81 = vcmask 31744
    %v83 = vsel %vm81, %v68, 0
    %vm85 = vcmask 1041408
    %v87 = vsel %vm85, %v79, 0
    %v90 = vsel %vm85, %v80, 0
    %92 = vmatprep.subr.bf16.mxu0 %v90
    %93 = vmatpush1.bf16.msra.mxu0 %v87
    %94 = vmatprep.subr.bf16.mxu0 0
    %95 = vmatpush1.bf16.msra.mxu0 0
    %96 = vmatprep.subr.bf16.mxu0 0
    %97 = vmatpush1.bf16.msra.mxu0 0
    %98 = vmatprep.subr.bf16.mxu0 0
    %99 = vmatpush1.bf16.msra.mxu0 0
    %100 = vmatprep.subr.bf16.mxu0 0
    %101 = vmatpush1.bf16.msra.mxu0 0
    %102 = vmatprep.subr.bf16.mxu0 0
    %103 = vmatpush1.bf16.msra.mxu0 0
    %104 = vmatprep.subr.bf16.mxu0 0
    %105 = vmatpush1.bf16.msra.mxu0 0
    %106 = vmatprep.subr.bf16.mxu0 0
    %107 = vmatpush1.bf16.msra.mxu0 0
    %108 = vmatprep.subr.bf16.mxu0 0
    %109 = vmatpush1.bf16.msra.mxu0 0
    %110 = vmatprep.subr.bf16.mxu0 0
    %111 = vmatpush1.bf16.msra.mxu0 0
    %112 = vmatprep.subr.bf16.mxu0 0
    %113 = vmatpush1.bf16.msra.mxu0 0
    %114 = vmatprep.subr.bf16.mxu0 0
    %115 = vmatpush1.bf16.msra.mxu0 0
    %116 = vmatprep.subr.bf16.mxu0 0
    %117 = vmatpush1.bf16.msra.mxu0 0
    %118 = vmatprep.subr.bf16.mxu0 0
    %119 = vmatpush1.bf16.msra.mxu0 0
    %120 = vmatprep.subr.bf16.mxu0 0
    %121 = vmatpush1.bf16.msra.mxu0 0
    %122 = vmatprep.subr.bf16.mxu0 0
    %123 = vmatpush1.bf16.msra.mxu0 0
    %124 = vmatprep.mubr.bf16.mxu0 0
    %125 = vmatmul.mubr.bf16.gmra.mrb[0].mxu0 %v83
    %v126 = vpop.f32.mrb[0].mxu0
    %v127 = vadd.f32 0.0, %v126
    %v128 = vpop.f32.mrb[0].mxu0
    %v129 = vadd.f32 0.0, %v128
    %v130 = vpop.f32.mrb[0].mxu0
    %v131 = vadd.f32 0.0, %v130
    %v132 = vpop.f32.mrb[0].mxu0
    %v133 = vadd.f32 0.0, %v132
    %134 = vdwg.mxu0
    %v137 = vunpack.c.l.b16 %v69
    %v138 = vunpack.c.h.b16 %v69
    %v139 = vunpack.c.l.b16 %v70
    %v140 = vunpack.c.h.b16 %v70
    %v141 = vpack.c.b16 %v139, %v137
    %v142 = vpack.c.b16 %v140, %v138
    %vm145 = vcmask 130048
    %v147 = vsel %vm145, %v65, 0
    %149 = vmatprep.subr.bf16.mxu0 %v142
    %150 = vmatpush1.bf16.msra.mxu0 %v141
    %151 = vmatprep.subr.bf16.mxu0 0
    %152 = vmatpush1.bf16.msra.mxu0 0
    %153 = vmatprep.subr.bf16.mxu0 0
    %154 = vmatpush1.bf16.msra.mxu0 0
    %155 = vmatprep.subr.bf16.mxu0 0
    %156 = vmatpush1.bf16.msra.mxu0 0
    %157 = vmatprep.subr.bf16.mxu0 0
    %158 = vmatpush1.bf16.msra.mxu0 0
    %159 = vmatprep.subr.bf16.mxu0 0
    %160 = vmatpush1.bf16.msra.mxu0 0
    %161 = vmatprep.subr.bf16.mxu0 0
    %162 = vmatpush1.bf16.msra.mxu0 0
    %163 = vmatprep.subr.bf16.mxu0 0
    %164 = vmatpush1.bf16.msra.mxu0 0
    %165 = vmatprep.subr.bf16.mxu0 0
    %166 = vmatpush1.bf16.msra.mxu0 0
    %167 = vmatprep.subr.bf16.mxu0 0
    %168 = vmatpush1.bf16.msra.mxu0 0
    %169 = vmatprep.subr.bf16.mxu0 0
    %170 = vmatpush1.bf16.msra.mxu0 0
    %171 = vmatprep.subr.bf16.mxu0 0
    %172 = vmatpush1.bf16.msra.mxu0 0
    %173 = vmatprep.subr.bf16.mxu0 0
    %174 = vmatpush1.bf16.msra.mxu0 0
    %175 = vmatprep.subr.bf16.mxu0 0
    %176 = vmatpush1.bf16.msra.mxu0 0
    %177 = vmatprep.subr.bf16.mxu0 0
    %178 = vmatpush1.bf16.msra.mxu0 0
    %179 = vmatprep.subr.bf16.mxu0 0
    %180 = vmatpush1.bf16.msra.mxu0 0
    %181 = vmatprep.mubr.bf16.mxu0 0
    %182 = vmatmul.mubr.bf16.gmra.mrb[0].mxu0 %v147
    %v183 = vpop.f32.mrb[0].mxu0
    %v184 = vadd.f32 %v127, %v183
    %v185 = vpop.f32.mrb[0].mxu0
    %v186 = vadd.f32 %v129, %v185
    %v187 = vpop.f32.mrb[0].mxu0
    %v188 = vadd.f32 %v131, %v187
    %v189 = vpop.f32.mrb[0].mxu0
    %v190 = vadd.f32 %v133, %v189
    %191 = vdwg.mxu0
    %v192 = vld [vmem:[%s4] sm:$0x3]
    %v194 = vlaneseq
    %v195 = vshrl.u32 %v194, 7
    %v196 = vsub.s32 0, %v195
    %v197 = vrot.slane %v192, %v196
    %v198 = vlaneseq
    %v199 = vshrl.u32 %v198, 7
    %v200 = vsub.s32 1, %v199
    %v201 = vrot.slane %v192, %v200
    %v204 = vadd.f32 %v184, %v197
    %v205 = vadd.f32 %v186, %v201
    %v206 = vadd.f32 %v188, %v197
    %v207 = vadd.f32 %v190, %v201
    %v208 = vmax.f32 %v204, 0.0
    %v209 = vmax.f32 %v205, 0.0
    %v210 = vmax.f32 %v206, 0.0
    %v211 = vmax.f32 %v207, 0.0
    %v212 = vpack.c.bf16 %v210, %v208
    %v213 = vpack.c.bf16 %v211, %v209
    %v214 = vld [vmem:[#allocation5] sm:$0xff]
    %v215 = vld [vmem:[#allocation5 + $0x8] sm:$0xff]
    %v216 = vld [vmem:[#allocation5 + $0x10] sm:$0xff]
    %v217 = vld [vmem:[#allocation5 + $0x18] sm:$0xff]
    %v218 = vld [vmem:[#allocation5 + $0x20] sm:$0xff]
    %v219 = vld [vmem:[#allocation5 + $0x28] sm:$0xff]
    %v220 = vld [vmem:[#allocation5 + $0x30] sm:$0xff]
    %v221 = vld [vmem:[#allocation5 + $0x38] sm:$0xff]
    %v222 = vld [vmem:[#allocation5 + $0x40] sm:$0xff]
    %v223 = vld [vmem:[#allocation5 + $0x48] sm:$0xff]
    %v224 = vld [vmem:[#allocation5 + $0x50] sm:$0xff]
    %v225 = vld [vmem:[#allocation5 + $0x58] sm:$0xff]
    %v226 = vld [vmem:[#allocation5 + $0x60] sm:$0xff]
    %v227 = vld [vmem:[#allocation5 + $0x68] sm:$0xff]
    %v228 = vld [vmem:[#allocation5 + $0x70] sm:$0xff]
    %v229 = vld [vmem:[#allocation5 + $0x78] sm:$0xff]
    %v230 = vld [vmem:[#allocation5 + $0x80] sm:$0xff]
    %v231 = vld [vmem:[#allocation5 + $0x88] sm:$0xff]
    %v232 = vld [vmem:[#allocation5 + $0x90] sm:$0xff]
    %v233 = vld [vmem:[#allocation5 + $0x98] sm:$0xff]
    %v234 = vld [vmem:[#allocation5 + $0xa0] sm:$0xff]
    %v235 = vld [vmem:[#allocation5 + $0xa8] sm:$0xff]
    %v236 = vld [vmem:[#allocation5 + $0xb0] sm:$0xff]
    %v237 = vld [vmem:[#allocation5 + $0xb8] sm:$0xff]
    %v238 = vld [vmem:[#allocation5 + $0xc0] sm:$0xff]
    %v239 = vld [vmem:[#allocation5 + $0xc8] sm:$0xff]
    %v240 = vld [vmem:[#allocation5 + $0xd0] sm:$0xff]
    %v241 = vld [vmem:[#allocation5 + $0xd8] sm:$0xff]
    %v242 = vld [vmem:[#allocation5 + $0xe0] sm:$0xff]
    %v243 = vld [vmem:[#allocation5 + $0xe8] sm:$0xff]
    %v244 = vld [vmem:[#allocation5 + $0xf0] sm:$0xff]
    %v245 = vld [vmem:[#allocation5 + $0xf8] sm:$0xff]
    %v246 = vld [vmem:[%s6] sm:$0x3]
    %v248 = vlaneseq
    %v249 = vshrl.u32 %v248, 7
    %v250 = vsub.s32 0, %v249
    %v251 = vrot.slane %v246, %v250
    %v252 = vlaneseq
    %v253 = vshrl.u32 %v252, 7
    %v254 = vsub.s32 1, %v253
    %v255 = vrot.slane %v246, %v254
    %v290 = vunpack.c.l.b16 %v214
    %v291 = vunpack.c.h.b16 %v214
    %v292 = vunpack.c.l.b16 %v215
    %v293 = vunpack.c.h.b16 %v215
    %v294 = vunpack.c.l.b16 %v216
    %v295 = vunpack.c.h.b16 %v216
    %v296 = vunpack.c.l.b16 %v217
    %v297 = vunpack.c.h.b16 %v217
    %v298 = vunpack.c.l.b16 %v218
    %v299 = vunpack.c.h.b16 %v218
    %v300 = vunpack.c.l.b16 %v219
    %v301 = vunpack.c.h.b16 %v219
    %v302 = vunpack.c.l.b16 %v220
    %v303 = vunpack.c.h.b16 %v220
    %v304 = vunpack.c.l.b16 %v221
    %v305 = vunpack.c.h.b16 %v221
    %v306 = vunpack.c.l.b16 %v222
    %v307 = vunpack.c.h.b16 %v222
    %v308 = vunpack.c.l.b16 %v223
    %v309 = vunpack.c.h.b16 %v223
    %v310 = vunpack.c.l.b16 %v224
    %v311 = vunpack.c.h.b16 %v224
    %v312 = vunpack.c.l.b16 %v225
    %v313 = vunpack.c.h.b16 %v225
    %v314 = vunpack.c.l.b16 %v226
    %v315 = vunpack.c.h.b16 %v226
    %v316 = vunpack.c.l.b16 %v227
    %v317 = vunpack.c.h.b16 %v227
    %v318 = vunpack.c.l.b16 %v228
    %v319 = vunpack.c.h.b16 %v228
    %v320 = vunpack.c.l.b16 %v229
    %v321 = vunpack.c.h.b16 %v229
    %v322 = vunpack.c.l.b16 %v230
    %v323 = vunpack.c.h.b16 %v230
    %v324 = vunpack.c.l.b16 %v231
    %v325 = vunpack.c.h.b16 %v231
    %v326 = vunpack.c.l.b16 %v232
    %v327 = vunpack.c.h.b16 %v232
    %v328 = vunpack.c.l.b16 %v233
    %v329 = vunpack.c.h.b16 %v233
    %v330 = vunpack.c.l.b16 %v234
    %v331 = vunpack.c.h.b16 %v234
    %v332 = vunpack.c.l.b16 %v235
    %v333 = vunpack.c.h.b16 %v235
    %v334 = vunpack.c.l.b16 %v236
    %v335 = vunpack.c.h.b16 %v236
    %v336 = vunpack.c.l.b16 %v237
    %v337 = vunpack.c.h.b16 %v237
    %v338 = vunpack.c.l.b16 %v238
    %v339 = vunpack.c.h.b16 %v238
    %v340 = vunpack.c.l.b16 %v239
    %v341 = vunpack.c.h.b16 %v239
    %v342 = vunpack.c.l.b16 %v240
    %v343 = vunpack.c.h.b16 %v240
    %v344 = vunpack.c.l.b16 %v241
    %v345 = vunpack.c.h.b16 %v241
    %v346 = vunpack.c.l.b16 %v242
    %v347 = vunpack.c.h.b16 %v242
    %v348 = vunpack.c.l.b16 %v243
    %v349 = vunpack.c.h.b16 %v243
    %v350 = vunpack.c.l.b16 %v244
    %v351 = vunpack.c.h.b16 %v244
    %v352 = vunpack.c.l.b16 %v245
    %v353 = vunpack.c.h.b16 %v245
    %v354 = vpack.c.b16 %v292, %v290
    %v355 = vpack.c.b16 %v293, %v291
    %v356 = vpack.c.b16 %v296, %v294
    %v357 = vpack.c.b16 %v297, %v295
    %v358 = vpack.c.b16 %v300, %v298
    %v359 = vpack.c.b16 %v301, %v299
    %v360 = vpack.c.b16 %v304, %v302
    %v361 = vpack.c.b16 %v305, %v303
    %v362 = vpack.c.b16 %v308, %v306
    %v363 = vpack.c.b16 %v309, %v307
    %v364 = vpack.c.b16 %v312, %v310
    %v365 = vpack.c.b16 %v313, %v311
    %v366 = vpack.c.b16 %v316, %v314
    %v367 = vpack.c.b16 %v317, %v315
    %v368 = vpack.c.b16 %v320, %v318
    %v369 = vpack.c.b16 %v321, %v319
    %v370 = vpack.c.b16 %v324, %v322
    %v371 = vpack.c.b16 %v325, %v323
    %v372 = vpack.c.b16 %v328, %v326
    %v373 = vpack.c.b16 %v329, %v327
    %v374 = vpack.c.b16 %v332, %v330
    %v375 = vpack.c.b16 %v333, %v331
    %v376 = vpack.c.b16 %v336, %v334
    %v377 = vpack.c.b16 %v337, %v335
    %v378 = vpack.c.b16 %v340, %v338
    %v379 = vpack.c.b16 %v341, %v339
    %v380 = vpack.c.b16 %v344, %v342
    %v381 = vpack.c.b16 %v345, %v343
    %v382 = vpack.c.b16 %v348, %v346
    %v383 = vpack.c.b16 %v349, %v347
    %v384 = vpack.c.b16 %v352, %v350
    %v385 = vpack.c.b16 %v353, %v351
    %418 = vmatprep.subr.bf16.mxu0 %v355
    %419 = vmatpush1.bf16.msra.mxu0 %v354
    %420 = vmatprep.subr.bf16.mxu0 %v357
    %421 = vmatpush1.bf16.msra.mxu0 %v356
    %422 = vmatprep.subr.bf16.mxu0 %v359
    %423 = vmatpush1.bf16.msra.mxu0 %v358
    %424 = vmatprep.subr.bf16.mxu0 %v361
    %425 = vmatpush1.bf16.msra.mxu0 %v360
    %426 = vmatprep.subr.bf16.mxu0 %v363
    %427 = vmatpush1.bf16.msra.mxu0 %v362
    %428 = vmatprep.subr.bf16.mxu0 %v365
    %429 = vmatpush1.bf16.msra.mxu0 %v364
    %430 = vmatprep.subr.bf16.mxu0 %v367
    %431 = vmatpush1.bf16.msra.mxu0 %v366
    %432 = vmatprep.subr.bf16.mxu0 %v369
    %433 = vmatpush1.bf16.msra.mxu0 %v368
    %434 = vmatprep.subr.bf16.mxu0 %v371
    %435 = vmatpush1.bf16.msra.mxu0 %v370
    %436 = vmatprep.subr.bf16.mxu0 %v373
    %437 = vmatpush1.bf16.msra.mxu0 %v372
    %438 = vmatprep.subr.bf16.mxu0 %v375
    %439 = vmatpush1.bf16.msra.mxu0 %v374
    %440 = vmatprep.subr.bf16.mxu0 %v377
    %441 = vmatpush1.bf16.msra.mxu0 %v376
    %442 = vmatprep.subr.bf16.mxu0 %v379
    %443 = vmatpush1.bf16.msra.mxu0 %v378
    %444 = vmatprep.subr.bf16.mxu0 %v381
    %445 = vmatpush1.bf16.msra.mxu0 %v380
    %446 = vmatprep.subr.bf16.mxu0 %v383
    %447 = vmatpush1.bf16.msra.mxu0 %v382
    %448 = vmatprep.subr.bf16.mxu0 %v385
    %449 = vmatpush1.bf16.msra.mxu0 %v384
    %450 = vmatprep.mubr.bf16.mxu0 %v213
    %451 = vmatmul.mubr.bf16.gmra.mrb[0].mxu0 %v212
    %v452 = vpop.f32.mrb[0].mxu0
    %v453 = vadd.f32 %v251, %v452
    %v454 = vpop.f32.mrb[0].mxu0
    %v455 = vadd.f32 %v255, %v454
    %v456 = vpop.f32.mrb[0].mxu0
    %v457 = vadd.f32 %v251, %v456
    %v458 = vpop.f32.mrb[0].mxu0
    %v459 = vadd.f32 %v255, %v458
    %460 = vdwg.mxu0
    %v461 = vmax.f32 %v453, 0.0
    %v462 = vmax.f32 %v455, 0.0
    %v463 = vmax.f32 %v457, 0.0
    %v464 = vmax.f32 %v459, 0.0
    %v465 = vld [vmem:[%s7] sm:$0x3]
    %v467 = vlaneseq
    %v468 = vshrl.u32 %v467, 7
    %v469 = vsub.s32 0, %v468
    %v470 = vrot.slane %v465, %v469
    %v471 = vlaneseq
    %v472 = vshrl.u32 %v471, 7
    %v473 = vsub.s32 1, %v472
    %v474 = vrot.slane %v465, %v473
    %v477 = vmul.f32 %v461, %v470
    %v478 = vmul.f32 %v462, %v474
    %v479 = vmul.f32 %v463, %v470
    %v480 = vmul.f32 %v464, %v474
    %v481 = vadd.f32 %v477, %v478
    %482 = vadd.xlane.f32.xlu0 %v481
    %v483 = vpop.xlane.xlu0 %482
    %v484 = vadd.f32 %v479, %v480
    %485 = vadd.xlane.f32.xlu0 %v484
    %v486 = vpop.xlane.xlu0 %485
    %v487 = vld [vmem:[#allocation2] sm:$0x1]
    %v489 = vlaneseq
    %v490 = vshrl.u32 %v489, 7
    %v491 = vsub.s32 0, %v490
    %v492 = vrot.slane %v487, %v491
    %v494 = vadd.f32 %v483, %v492
    %v495 = vadd.f32 %v486, %v492
    %vm496 = vcmask 7168
    %497 = vst.msk [vmem:[%s9] sm:$0xff] %vm496, %v494
    %498 = vst.msk [vmem:[%s9 + $0x8] sm:$0xff] %vm496, %v495
    // Predicated region
    $region46: #{tpu_custom_call.1} parent=1 // pred_check
      _
    $region47: #{tpu_custom_call.1} parent=1 // pred_check_branch
      %500 = sbr.rel (0) target = $region49
    $region48: #{tpu_custom_call.1} parent=1 // pred_region
      _
    $region49: #{tpu_custom_call.1} parent=1 // pred_fallthru
      _
    // Predicated region
    $region50: #{tpu_custom_call.1} parent=1 // pred_check
      _
    $region51: #{tpu_custom_call.1} parent=1 // pred_check_branch
      %502 = sbr.rel (0) target = $region53
    $region52: #{tpu_custom_call.1} parent=1 // pred_region
      _
    $region53: #{tpu_custom_call.1} parent=1 // pred_fallthru
      _
    %503 = vsyncpa [#allocation4], 1
    %504 = vsyncpa [#allocation6], 1

</llo_original>
